<compile_context>
chip_gen: v6e
topology: v6e:2x2x1
jax: 0.10.0
libtpu: 0.0.40
codegen_flags: <defaults>
</compile_context>

<pallas_src>
import numpy as np
import jax
import jax.numpy as jnp
from jax.experimental import pallas as pl
from jax.experimental.pallas import tpu as pltpu


def transition_kernel(x_ref, scale_ref, shift_ref, pool_ref, w_ref, o_ref):
    # x_ref     : (Cin, TBIG)        activation slab: THo whole 2-row groups, lane-dense
    # scale_ref : (Cin, 1)           folded BN scale  (gamma / sqrt(var+eps))
    # shift_ref : (Cin, 1)           folded BN shift  (beta - mean*scale)
    # pool_ref  : (TBIG, TBIG//4)    block-diagonal 2x2 avg-pool matrix (0.25 folded in)
    # w_ref     : (Cout_pad, Cin)    1x1 conv weight (rows zero-padded to a multiple of 8)
    # o_ref     : (Cout_pad, TBIG//4) f32, already channel-major (NCHW order)
    x = x_ref[...]
    # BN + ReLU: one mul + one add + one max per element (lane-broadcast of (Cin,1)).
    y = jnp.maximum(x * scale_ref[...] + shift_ref[...], 0)
    # 2x2 average pooling as a matmul (linear, commutes with the 1x1 conv); MXU, f32 acc.
    pooled = jnp.dot(y, pool_ref[...], preferred_element_type=jnp.float32)
    # 1x1 conv == channel matmul on the MXU, f32 accumulate.  (At toy channel counts this
    # under-fills the MXU; the kernel is HBM-bound so the near-empty pass is free.)
    o_ref[...] = jnp.dot(w_ref[...], pooled.astype(w_ref.dtype),
                         preferred_element_type=jnp.float32).astype(o_ref.dtype)


def _vmem_budget_bytes():
    """Chip-aware VMEM budget with headroom under the physical capacity."""
    try:
        phys = pltpu.get_tpu_info().vmem_capacity_bytes
    except Exception:
        phys = 64 * 1024 * 1024          # conservative fallback (v7x: 64 MiB / TensorCore)
    return int(phys * 0.7)               # v7x ~45 MiB, v5e/v6e ~90 MiB


def _pick_row_tile(Ho, W, Cin, Cout_pad, itemsize, budget, max_tbig=4096):
    """Largest output-row tile THo (divisor of Ho) such that:
       * input slab TBIG=2*W*THo and output T_out=TBIG/4 are lane-aligned (%512 / %128)
         unless the tile is the full image,
       * all double-buffered blocks + temporaries fit the chip-aware VMEM budget."""
    def est(tho):
        tbig = 2 * W * tho
        tout = tbig // 4
        b = 2 * Cin * tbig * itemsize            # x block (double-buffered)
        b += 2 * Cout_pad * tout * 4             # output block f32 (double-buffered)
        b += 2 * tbig * tout * itemsize          # pooling matrix (double-buffered)
        b += 2 * Cout_pad * Cin * itemsize       # weight
        b += Cin * tbig * itemsize               # BN/ReLU temporary
        b += Cin * tout * (4 + itemsize)         # pooled f32 + bf16 cast
        return b

    valid = [t for t in range(1, Ho + 1)
             if Ho % t == 0 and (t == Ho or (2 * W * t) % 512 == 0)]
    fitting = [t for t in valid if est(t) <= budget and 2 * W * t <= max_tbig]
    if fitting:
        return max(fitting)
    # TODO(synk): pathological shapes (no lane-aligned divisor fits the budget) would need
    # a padded/masked last tile; fall back to the smallest legal tile instead.
    return min(valid)


def transition_forward(x_nchw, gamma, beta, running_mean, running_var, conv_w,
                       eps=1e-5, use_bf16=True):
    """Forward pass of Transition (BN eval mode). x_nchw: (N, Cin, H, W) f32 -> NCHW out."""
    N, Cin, H, W = x_nchw.shape
    Cout = conv_w.shape[0]

    # AvgPool2d(2) floors odd spatial dims (drops trailing row/col), like PyTorch.
    if (H % 2) or (W % 2):
        H, W = (H // 2) * 2, (W // 2) * 2
        x_nchw = x_nchw[:, :, :H, :W]
    Ho, Wo = H // 2, W // 2
    S, So = H * W, Ho * Wo

    # bf16 everywhere on the hot path (activations, BN affine, matmul operands); f32 acc.
    # (On v5e bf16 VALU is emulated, but halving HBM bytes still dominates.)
    cdtype = jnp.bfloat16 if use_bf16 else jnp.float32
    itemsize = 2 if use_bf16 else 4

    # Fold BatchNorm (inference) into scale/shift: y = x*scale + shift.
    scale = gamma / jnp.sqrt(running_var + eps)
    shift = beta - running_mean * scale
    scale = scale.reshape(Cin, 1).astype(cdtype)
    shift = shift.reshape(Cin, 1).astype(cdtype)

    # 1x1 conv weight, channel-major, rows zero-padded to a multiple of 8 (unmasked stores).
    Cout_pad = -(-Cout // 8) * 8
    w_mat = conv_w[:, :, 0, 0].astype(cdtype)
    if Cout_pad != Cout:
        w_mat = jnp.concatenate([w_mat, jnp.zeros((Cout_pad - Cout, Cin), cdtype)], axis=0)

    # x stays in NCHW; (N, Cin, H*W) is a free reshape — no HBM rearrange.
    # TODO(synk): the dtype cast is the only extra HBM pass; it fuses upstream in a full net.
    x_flat = x_nchw.reshape(N, Cin, S).astype(cdtype)

    budget = _vmem_budget_bytes()
    THo = _pick_row_tile(Ho, W, Cin, Cout_pad, itemsize, budget)
    TBIG = 2 * W * THo            # input elements per tile = THo whole 2-row groups
    T_out = TBIG // 4             # pooled elements per tile = THo * Wo
    grid = (N, Ho // THo)

    # Block-diagonal 2x2 average-pooling matrix for one tile (0.25 folded in, exact in bf16).
    rows = np.arange(TBIG)
    cols = (rows // (2 * W)) * Wo + (rows % W) // 2
    pool_np = np.zeros((TBIG, T_out), np.float32)
    pool_np[rows, cols] = 0.25
    pool_mat = jnp.asarray(pool_np, dtype=cdtype)

    in_specs = [
        pl.BlockSpec((None, Cin, TBIG), lambda n, t: (n, 0, t)),   # activations: 1 DMA/step
        pl.BlockSpec((Cin, 1), lambda n, t: (0, 0)),               # BN scale   (constant)
        pl.BlockSpec((Cin, 1), lambda n, t: (0, 0)),               # BN shift   (constant)
        pl.BlockSpec((TBIG, T_out), lambda n, t: (0, 0)),          # pool matrix(constant)
        pl.BlockSpec((Cout_pad, Cin), lambda n, t: (0, 0)),        # conv weight(constant)
    ]
    out_spec = pl.BlockSpec((None, Cout_pad, T_out), lambda n, t: (n, 0, t))

    out = pl.pallas_call(
        transition_kernel,
        out_shape=jax.ShapeDtypeStruct((N, Cout_pad, So), jnp.float32),
        grid_spec=pltpu.PrefetchScalarGridSpec(
            num_scalar_prefetch=0,
            grid=grid,
            in_specs=in_specs,
            out_specs=out_spec,
        ),
        compiler_params=pltpu.CompilerParams(
            dimension_semantics=("parallel", "parallel"),
            vmem_limit_bytes=budget,
        ),
    )(x_flat, scale, shift, pool_mat, w_mat)

    # (N, Cout_pad, Ho*Wo) is already channel-major -> plain reshape, then drop pad rows.
    out = out.reshape(N, Cout_pad, Ho, Wo)
    return out[:, :Cout] if Cout_pad != Cout else out


def transition_reference(x, gamma, beta, rm, rv, conv_w, eps=1e-5):
    """Pure-JAX reference matching PyTorch semantics (BN in eval mode)."""
    xn = (x - rm[None, :, None, None]) / jnp.sqrt(rv[None, :, None, None] + eps)
    y = jnp.maximum(xn * gamma[None, :, None, None] + beta[None, :, None, None], 0.0)
    z = jnp.einsum('nchw,oc->nohw', y, conv_w[:, :, 0, 0])
    N, Co, H, W = z.shape
    return z.reshape(N, Co, H // 2, 2, W // 2, 2).mean(axis=(3, 5))


if __name__ == "__main__":
    # Transition(in_channels=8, out_channels=4), input NCHW (2, 8, 16, 16).
    N, Cin, Cout, H, W = 2, 8, 4, 16, 16

    key = jax.random.PRNGKey(0)
    kx, kg, kb, km, kv, kw = jax.random.split(key, 6)

    x = jax.random.normal(kx, (N, Cin, H, W), dtype=jnp.float32)
    gamma = jax.random.normal(kg, (Cin,), dtype=jnp.float32) * 0.1 + 1.0
    beta = jax.random.normal(kb, (Cin,), dtype=jnp.float32) * 0.1
    running_mean = jax.random.normal(km, (Cin,), dtype=jnp.float32) * 0.1
    running_var = jax.random.uniform(kv, (Cin,), dtype=jnp.float32, minval=0.5, maxval=1.5)
    conv_w = jax.random.normal(kw, (Cout, Cin, 1, 1), dtype=jnp.float32) * 0.2

    ref = transition_reference(x, gamma, beta, running_mean, running_var, conv_w)

    # f32 path: tight correctness check.
    out_f32 = jax.block_until_ready(
        transition_forward(x, gamma, beta, running_mean, running_var, conv_w, use_bf16=False))
    assert out_f32.shape == (N, Cout, H // 2, W // 2), out_f32.shape
    np.testing.assert_allclose(np.asarray(out_f32), np.asarray(ref), rtol=1e-4, atol=1e-5)

    # bf16 hot path (default): looser tolerance.
    out_bf16 = jax.block_until_ready(
        transition_forward(x, gamma, beta, running_mean, running_var, conv_w, use_bf16=True))
    assert out_bf16.shape == (N, Cout, H // 2, W // 2), out_bf16.shape
    np.testing.assert_allclose(np.asarray(out_bf16), np.asarray(ref), rtol=3e-2, atol=3e-2)

    print("KERNEL_OK")
</pallas_src>

<mosaic_0001>
module attributes {stable_mosaic.version = 11 : i64} {
  func.func @transition_kernel(%arg0: i32, %arg1: i32, %arg2: memref<1x8x256xf32, #tpu.memory_space<vmem>>, %arg3: memref<8x1xf32, #tpu.memory_space<vmem>>, %arg4: memref<8x1xf32, #tpu.memory_space<vmem>>, %arg5: memref<256x64xf32, #tpu.memory_space<vmem>>, %arg6: memref<8x8xf32, #tpu.memory_space<vmem>>, %arg7: memref<1x8x64xf32, #tpu.memory_space<vmem>>) attributes {dimension_semantics = [#tpu.dimension_semantics<parallel>, #tpu.dimension_semantics<parallel>], iteration_bounds = array<i64: 2, 1>, scalar_prefetch = 0 : i64, scratch_operands = 0 : i64, tpu.core_type = #tpu.core_type<tc>, window_params = [{transform_indices = @transform_0, window_bounds = array<i64: 1, 8, 256>}, {pipeline_mode = #tpu.pipeline_mode<synchronous>, transform_indices = @transform_1, window_bounds = array<i64: 8, 1>}, {pipeline_mode = #tpu.pipeline_mode<synchronous>, transform_indices = @transform_2, window_bounds = array<i64: 8, 1>}, {pipeline_mode = #tpu.pipeline_mode<synchronous>, transform_indices = @transform_3, window_bounds = array<i64: 256, 64>}, {pipeline_mode = #tpu.pipeline_mode<synchronous>, transform_indices = @transform_4, window_bounds = array<i64: 8, 8>}, {transform_indices = @transform_5, window_bounds = array<i64: 1, 8, 64>}]} {
    %c0 = arith.constant 0 : index
    %c0_0 = arith.constant 0 : index
    %c0_1 = arith.constant 0 : index
    %0 = vector.load %arg2[%c0, %c0_0, %c0_1] : memref<1x8x256xf32, #tpu.memory_space<vmem>>, vector<1x8x256xf32>
    %1 = vector.shape_cast %0 : vector<1x8x256xf32> to vector<8x256xf32>
    %c0_2 = arith.constant 0 : index
    %c0_3 = arith.constant 0 : index
    %2 = vector.load %arg3[%c0_2, %c0_3] : memref<8x1xf32, #tpu.memory_space<vmem>>, vector<8x1xf32>
    %3 = vector.broadcast %2 : vector<8x1xf32> to vector<8x256xf32>
    %4 = arith.mulf %1, %3 : vector<8x256xf32>
    %c0_4 = arith.constant 0 : index
    %c0_5 = arith.constant 0 : index
    %5 = vector.load %arg4[%c0_4, %c0_5] : memref<8x1xf32, #tpu.memory_space<vmem>>, vector<8x1xf32>
    %6 = vector.broadcast %5 : vector<8x1xf32> to vector<8x256xf32>
    %7 = arith.addf %4, %6 : vector<8x256xf32>
    %cst = arith.constant 0.000000e+00 : f32
    %8 = vector.broadcast %cst : f32 to vector<8x256xf32>
    %9 = arith.maximumf %7, %8 : vector<8x256xf32>
    %c0_6 = arith.constant 0 : index
    %c0_7 = arith.constant 0 : index
    %10 = vector.load %arg5[%c0_6, %c0_7] : memref<256x64xf32, #tpu.memory_space<vmem>>, vector<256x64xf32>
    %cst_8 = arith.constant dense<0.000000e+00> : vector<8x64xf32>
    %11 = tpu.matmul %9, %10, %cst_8 {dimension_numbers = #tpu.dot_dimension_numbers<[1], [0], [0], [1], [0, 0, 1, 1], [], []>} : vector<8x256xf32>, vector<256x64xf32>, vector<8x64xf32> -> vector<8x64xf32>
    %c0_9 = arith.constant 0 : index
    %c0_10 = arith.constant 0 : index
    %12 = vector.load %arg6[%c0_9, %c0_10] : memref<8x8xf32, #tpu.memory_space<vmem>>, vector<8x8xf32>
    %cst_11 = arith.constant dense<0.000000e+00> : vector<8x64xf32>
    %13 = tpu.matmul %12, %11, %cst_11 {dimension_numbers = #tpu.dot_dimension_numbers<[1], [0], [0], [1], [0, 0, 1, 1], [], []>} : vector<8x8xf32>, vector<8x64xf32>, vector<8x64xf32> -> vector<8x64xf32>
    %c0_12 = arith.constant 0 : index
    %c0_13 = arith.constant 0 : index
    %c0_14 = arith.constant 0 : index
    %14 = vector.load %arg7[%c0_12, %c0_13, %c0_14] : memref<1x8x64xf32, #tpu.memory_space<vmem>>, vector<1x8x64xf32>
    %15 = vector.shape_cast %14 : vector<1x8x64xf32> to vector<8x64xf32>
    %16 = vector.shape_cast %13 : vector<8x64xf32> to vector<1x8x64xf32>
    tpu.vector_store %arg7[%c0_12, %c0_13, %c0_14], %16 {strides = array<i32>} : memref<1x8x64xf32, #tpu.memory_space<vmem>>, vector<1x8x64xf32>,
    return
  }
  func.func @transform_0(%arg0: i32, %arg1: i32) -> (i32, i32, i32) {
    %c0_i32 = arith.constant 0 : i32
    %c0_i32_0 = arith.constant 0 : i32
    return %arg0, %c0_i32, %arg1 : i32, i32, i32
  }
  func.func @transform_1(%arg0: i32, %arg1: i32) -> (i32, i32) {
    %c0_i32 = arith.constant 0 : i32
    %c0_i32_0 = arith.constant 0 : i32
    %c0_i32_1 = arith.constant 0 : i32
    return %c0_i32, %c0_i32_0 : i32, i32
  }
  func.func @transform_2(%arg0: i32, %arg1: i32) -> (i32, i32) {
    %c0_i32 = arith.constant 0 : i32
    %c0_i32_0 = arith.constant 0 : i32
    %c0_i32_1 = arith.constant 0 : i32
    return %c0_i32, %c0_i32_0 : i32, i32
  }
  func.func @transform_3(%arg0: i32, %arg1: i32) -> (i32, i32) {
    %c0_i32 = arith.constant 0 : i32
    %c0_i32_0 = arith.constant 0 : i32
    %c0_i32_1 = arith.constant 0 : i32
    return %c0_i32, %c0_i32_0 : i32, i32
  }
  func.func @transform_4(%arg0: i32, %arg1: i32) -> (i32, i32) {
    %c0_i32 = arith.constant 0 : i32
    %c0_i32_0 = arith.constant 0 : i32
    %c0_i32_1 = arith.constant 0 : i32
    return %c0_i32, %c0_i32_0 : i32, i32
  }
  func.func @transform_5(%arg0: i32, %arg1: i32) -> (i32, i32, i32) {
    %c0_i32 = arith.constant 0 : i32
    %c0_i32_0 = arith.constant 0 : i32
    return %arg0, %c0_i32, %arg1 : i32, i32, i32
  }
}

</mosaic_0001>

<llo_original>
// kernel: tpu_custom_call.1
$region0: #{tpu_custom_call.1}
  #allocation0 [shape = 'u32[]', space=smem, size = 0x4, offset = 0x4, fixed_abs, tag = 'smem constant byte address 0x4 - core index']
  #allocation1 [shape = 'u32[144,128]{1,0:T(1,128)}', space=vmem, size = 0x12000, scoped, tag = 'internal scratch']
  %s0 = inlined_call_operand.vmem [shape: f32[2,8,256], index: 0, kind: input, shape index: {}]
  %s1 = inlined_call_operand.vmem [shape: f32[8,1], index: 1, kind: input, shape index: {}]
  %s2 = inlined_call_operand.vmem [shape: f32[8,1], index: 2, kind: input, shape index: {}]
  %s3 = inlined_call_operand.vmem [shape: f32[256,64], index: 3, kind: input, shape index: {}]
  %s4 = inlined_call_operand.vmem [shape: f32[8,8], index: 4, kind: input, shape index: {}]
  %s5 = inlined_call_operand.hbm [shape: f32[2,8,64], index: 5, kind: output, shape index: {}]
  %s6 = sld [smem:[#allocation0]]
  $region53: #{tpu_custom_call.1} parent=0
    _
  %s8 = ssub.s32 1, %s6
  %s9 = scalar_select 0, %s8, %s6
  $region1: #{tpu_custom_call.1} parent=0
    #allocation2 [shape = 'u8[8192]{0}', space=vmem, size = 0x2000, scoped, tag = 'output window, operand 0']
    #allocation3 [shape = 's32[2]{0}', space=sflag, size = 0x8, scoped, tag = 'scoped memory for tpu_custom_call.1']
    %10 = vsyncpa [#allocation3], 0
    %s11 = scalar_lea.sflag [#allocation3], 1
    %12 = vsyncpa %s11, 0
    loop: start=0, step=1, limit=4
    $region2: #{tpu_custom_call.1} parent=1 // loop_pre_header
      _
    $region3: #{tpu_custom_call.1} parent=1 // loop_header
      %s14 = sphi 0, %s18
      %p15 = scmp.ge.s32.totalorder %s14, 4
      %s21 = sphi 0, %s33
      %s22 = sphi 0, %s29
      %s23 = sphi 0, %s21
      %s24 = sphi 0, %s22
      %s25 = sphi 0, %s23
      %s26 = sphi 0, %s24
      %s38 = sphi 0, %s40
      %s41 = sphi 0, %s38
      %s42 = sphi 0, %s41
      %s58 = sphi 0, %s42
      %s62 = sphi 0, %s62
      %s64 = sphi 0, %s62
      %s65 = sphi 0, %s64
      %s79 = sphi 0, %s65
      %s83 = sphi 0, %s83
      %s85 = sphi 0, %s83
      %s86 = sphi 0, %s85
      %s100 = sphi 0, %s86
      %s104 = sphi 0, %s104
      %s106 = sphi 0, %s104
      %s107 = sphi 0, %s106
      %s121 = sphi 0, %s107
      %s125 = sphi 0, %s125
      %s127 = sphi 0, %s125
      %s128 = sphi 0, %s127
      %s142 = sphi 0, %s128
      %s150 = sphi 0, %s152
      %s153 = sphi 0, %s150
      %s154 = sphi 0, %s153
      %s170 = sphi 0, %s154
    $region4: #{tpu_custom_call.1} parent=1 // loop_header_branch
      %17 = sbr.rel (%p15) target = $region8
    $region5: #{tpu_custom_call.1} parent=1 // loop_body
      %s19 = ssub.s32 %s14, 1
      %s20 = ssub.s32 %s14, 2
      %s27 = sadd.s32 1, %s22
      %p28 = scmp.ge.s32.totalorder %s27, 1
      %s29 = scalar_select %p28, 0, %s27
      %s30 = sadd.s32 1, %s21
      %s31 = scalar_select %p28, %s30, %s21
      %p32 = scmp.ge.s32.totalorder %s31, 2
      %s33 = scalar_select %p32, 0, %s31
      %s34 = ssub.s32 %s21, %s33
      %s35 = ssub.s32 %s22, %s29
      %s36 = sor.u32 %s34, %s35
      %p37 = scmp.eq.s32.totalorder %s36, 0
      %s39 = sadd.s32 %s38, 1
      %s40 = scalar_select %p37, %s38, %s39
      %p43 = pneg %p37
      %p44 = scmp.eq.s32.totalorder %s14, 1
      %p45 = por %p43, %p44
      %p46 = scmp.ne.s32.totalorder %s38, %s41
      %p47 = scmp.eq.s32.totalorder %s14, 0
      %p48 = por %p46, %p47
      %p49 = scmp.ne.s32.totalorder %s38, %s41
      %p50 = scmp.eq.s32.totalorder %s19, 1
      %p51 = por %p49, %p50
      %p52 = scmp.ne.s32.totalorder %s41, %s42
      %p53 = scmp.eq.s32.totalorder %s19, 0
      %p54 = por %p52, %p53
      %p55 = scmp.ne.s32.totalorder %s41, %s42
      %p56 = scmp.eq.s32.totalorder %s20, 1
      %p57 = por %p55, %p56
      %p59 = scmp.ne.s32.totalorder %s42, %s58
      %p60 = scmp.eq.s32.totalorder %s20, 0
      %p61 = por %p59, %p60
      %s63 = sadd.s32 %s62, 1
      %p66 = scmp.eq.s32.totalorder %s14, 1
      %p67 = scmp.ne.s32.totalorder %s62, %s64
      %p68 = scmp.eq.s32.totalorder %s14, 0
      %p69 = por %p67, %p68
      %p70 = scmp.ne.s32.totalorder %s62, %s64
      %p71 = scmp.eq.s32.totalorder %s19, 1
      %p72 = por %p70, %p71
      %p73 = scmp.ne.s32.totalorder %s64, %s65
      %p74 = scmp.eq.s32.totalorder %s19, 0
      %p75 = por %p73, %p74
      %p76 = scmp.ne.s32.totalorder %s64, %s65
      %p77 = scmp.eq.s32.totalorder %s20, 1
      %p78 = por %p76, %p77
      %p80 = scmp.ne.s32.totalorder %s65, %s79
      %p81 = scmp.eq.s32.totalorder %s20, 0
      %p82 = por %p80, %p81
      %s84 = sadd.s32 %s83, 1
      %p87 = scmp.eq.s32.totalorder %s14, 1
      %p88 = scmp.ne.s32.totalorder %s83, %s85
      %p89 = scmp.eq.s32.totalorder %s14, 0
      %p90 = por %p88, %p89
      %p91 = scmp.ne.s32.totalorder %s83, %s85
      %p92 = scmp.eq.s32.totalorder %s19, 1
      %p93 = por %p91, %p92
      %p94 = scmp.ne.s32.totalorder %s85, %s86
      %p95 = scmp.eq.s32.totalorder %s19, 0
      %p96 = por %p94, %p95
      %p97 = scmp.ne.s32.totalorder %s85, %s86
      %p98 = scmp.eq.s32.totalorder %s20, 1
      %p99 = por %p97, %p98
      %p101 = scmp.ne.s32.totalorder %s86, %s100
      %p102 = scmp.eq.s32.totalorder %s20, 0
      %p103 = por %p101, %p102
      %s105 = sadd.s32 %s104, 1
      %p108 = scmp.eq.s32.totalorder %s14, 1
      %p109 = scmp.ne.s32.totalorder %s104, %s106
      %p110 = scmp.eq.s32.totalorder %s14, 0
      %p111 = por %p109, %p110
      %p112 = scmp.ne.s32.totalorder %s104, %s106
      %p113 = scmp.eq.s32.totalorder %s19, 1
      %p114 = por %p112, %p113
      %p115 = scmp.ne.s32.totalorder %s106, %s107
      %p116 = scmp.eq.s32.totalorder %s19, 0
      %p117 = por %p115, %p116
      %p118 = scmp.ne.s32.totalorder %s106, %s107
      %p119 = scmp.eq.s32.totalorder %s20, 1
      %p120 = por %p118, %p119
      %p122 = scmp.ne.s32.totalorder %s107, %s121
      %p123 = scmp.eq.s32.totalorder %s20, 0
      %p124 = por %p122, %p123
      %s126 = sadd.s32 %s125, 1
      %p129 = scmp.eq.s32.totalorder %s14, 1
      %p130 = scmp.ne.s32.totalorder %s125, %s127
      %p131 = scmp.eq.s32.totalorder %s14, 0
      %p132 = por %p130, %p131
      %p133 = scmp.ne.s32.totalorder %s125, %s127
      %p134 = scmp.eq.s32.totalorder %s19, 1
      %p135 = por %p133, %p134
      %p136 = scmp.ne.s32.totalorder %s127, %s128
      %p137 = scmp.eq.s32.totalorder %s19, 0
      %p138 = por %p136, %p137
      %p139 = scmp.ne.s32.totalorder %s127, %s128
      %p140 = scmp.eq.s32.totalorder %s20, 1
      %p141 = por %p139, %p140
      %p143 = scmp.ne.s32.totalorder %s128, %s142
      %p144 = scmp.eq.s32.totalorder %s20, 0
      %p145 = por %p143, %p144
      %s146 = ssub.s32 %s21, %s33
      %s147 = ssub.s32 %s22, %s29
      %s148 = sor.u32 %s146, %s147
      %p149 = scmp.eq.s32.totalorder %s148, 0
      %s151 = sadd.s32 %s150, 1
      %s152 = scalar_select %p149, %s150, %s151
      %p155 = pneg %p149
      %p156 = scmp.eq.s32.totalorder %s14, 1
      %p157 = por %p155, %p156
      %p158 = scmp.ne.s32.totalorder %s150, %s153
      %p159 = scmp.eq.s32.totalorder %s14, 0
      %p160 = por %p158, %p159
      %p161 = scmp.ne.s32.totalorder %s150, %s153
      %p162 = scmp.eq.s32.totalorder %s19, 1
      %p163 = por %p161, %p162
      %p164 = scmp.ne.s32.totalorder %s153, %s154
      %p165 = scmp.eq.s32.totalorder %s19, 0
      %p166 = por %p164, %p165
      %p167 = scmp.ne.s32.totalorder %s153, %s154
      %p168 = scmp.eq.s32.totalorder %s20, 1
      %p169 = por %p167, %p168
      %p171 = scmp.ne.s32.totalorder %s154, %s170
      %p172 = scmp.eq.s32.totalorder %s20, 0
      %p173 = por %p171, %p172
      %p174 = scmp.le.s32.totalorder 1, %s14
      %p175 = scmp.lt.s32.totalorder %s14, 3
      %p176 = pnand %p174, %p175
      %p177 = pneg %p176
      // Predicated region
      $region9: #{tpu_custom_call.1} parent=5 // pred_check
        _
      $region10: #{tpu_custom_call.1} parent=5 // pred_check_branch
        %179 = sbr.rel (%p176) target = $region12
      $region11: #{tpu_custom_call.1} parent=5 // pred_region
        %s180 = ssub.s32 %s14, 1
        // Predicated region
        $region13: #{tpu_custom_call.1} parent=11 // pred_check
          %p181 = pneg %p75
        $region14: #{tpu_custom_call.1} parent=11 // pred_check_branch
          %183 = sbr.rel (%p181) target = $region16
        $region15: #{tpu_custom_call.1} parent=11 // pred_region
          _
        $region16: #{tpu_custom_call.1} parent=11 // pred_fallthru
          _
        // Predicated region
        $region17: #{tpu_custom_call.1} parent=11 // pred_check
          %p184 = pneg %p96
        $region18: #{tpu_custom_call.1} parent=11 // pred_check_branch
          %186 = sbr.rel (%p184) target = $region20
        $region19: #{tpu_custom_call.1} parent=11 // pred_region
          _
        $region20: #{tpu_custom_call.1} parent=11 // pred_fallthru
          _
        // Predicated region
        $region21: #{tpu_custom_call.1} parent=11 // pred_check
          %p187 = pneg %p117
        $region22: #{tpu_custom_call.1} parent=11 // pred_check_branch
          %189 = sbr.rel (%p187) target = $region24
        $region23: #{tpu_custom_call.1} parent=11 // pred_region
          _
        $region24: #{tpu_custom_call.1} parent=11 // pred_fallthru
          _
        // Predicated region
        $region25: #{tpu_custom_call.1} parent=11 // pred_check
          %p190 = pneg %p138
        $region26: #{tpu_custom_call.1} parent=11 // pred_check_branch
          %192 = sbr.rel (%p190) target = $region28
        $region27: #{tpu_custom_call.1} parent=11 // pred_region
          _
        $region28: #{tpu_custom_call.1} parent=11 // pred_fallthru
          _
      $region12: #{tpu_custom_call.1} parent=5 // pred_fallthru
        _
      %p193 = scmp.lt.s32.totalorder %s14, 2
      // Predicated region
      $region29: #{tpu_custom_call.1} parent=5 // pred_check
        %p194 = pneg %p193
      $region30: #{tpu_custom_call.1} parent=5 // pred_check_branch
        %196 = sbr.rel (%p194) target = $region32
      $region31: #{tpu_custom_call.1} parent=5 // pred_region
        // Predicated region
        $region33: #{tpu_custom_call.1} parent=31 // pred_check
          %p197 = pneg %p48
        $region34: #{tpu_custom_call.1} parent=31 // pred_check_branch
          %199 = sbr.rel (%p197) target = $region36
        $region35: #{tpu_custom_call.1} parent=31 // pred_region
          %s200 = smul.u32 2, %s22
          %p201 = scmp.lt.s32.totalorder %s21, 1
          %s202 = scalar_select %p201, %s21, 1
          %p203 = scmp.lt.s32.totalorder %s200, 1
          %s204 = scalar_select %p203, %s200, 1
          %s205 = smul.addr %s202, 2
          %s206 = sadd.s32 %s204, %s205
          %s207 = smul.addr %s206, 8
          %s208 = scalar_lea.vmem %s0, %s207
          %s209 = smul.u32 2, %s22
        $region36: #{tpu_custom_call.1} parent=31 // pred_fallthru
          _
      $region32: #{tpu_custom_call.1} parent=5 // pred_fallthru
        _
      %p210 = scmp.le.s32.totalorder 1, %s14
      %p211 = scmp.lt.s32.totalorder %s14, 3
      %p212 = pnand %p210, %p211
      %p213 = pneg %p212
      // Predicated region
      $region37: #{tpu_custom_call.1} parent=5 // pred_check
        _
      $region38: #{tpu_custom_call.1} parent=5 // pred_check_branch
        %215 = sbr.rel (%p212) target = $region40
      $region39: #{tpu_custom_call.1} parent=5 // pred_region
        %s216 = ssub.s32 %s14, 1
        %s217 = smul.u32 2, %s24
        %p218 = scmp.lt.s32.totalorder %s23, 1
        %s219 = scalar_select %p218, %s23, 1
        %p220 = scmp.lt.s32.totalorder %s217, 1
        %s221 = scalar_select %p220, %s217, 1
        %s222 = smul.addr %s219, 2
        %s223 = sadd.s32 %s221, %s222
        %s224 = smul.addr %s223, 8
        %s225 = scalar_lea.vmem %s0, %s224
        %p226 = pneg %p54
        %p227 = pneg %p51
        %p228 = pneg %p75
        %p229 = pneg %p72
        %p230 = pneg %p96
        %p231 = pneg %p93
        %p232 = pneg %p117
        %p233 = pneg %p114
        %p234 = pneg %p138
        %p235 = pneg %p135
        %p236 = pneg %p166
        %p237 = pneg %p163
        %s238 = sand.u32 %s153, 1
        %s239 = scalar_lea.sflag [#allocation3], %s238
        %s240 = sand.u32 %s153, 1
        %s241 = smul.addr %s240, 8
        %s242 = scalar_lea.vmem [#allocation2], %s241
        %s243 = smul.u32 2, %s24
        %p244 = scmp.lt.s32.totalorder %s23, 1
        %s245 = scalar_select %p244, %s23, 1
        %p246 = scmp.lt.s32.totalorder %s243, 1
        %s247 = scalar_select %p246, %s243, 1
        %s248 = smul.addr %s245, 2
        %s249 = sadd.s32 %s247, %s248
        %s250 = smul.addr %s249, 8
        %s251 = scalar_lea.vmem %s0, %s250
        %s252 = smul.u32 2, %s24
        %v253 = vld [vmem:[%s251] sm:$0xff]
        %v254 = vld [vmem:[%s251 + $0x8] sm:$0xff]
        %v255 = vld [vmem:[%s1] sm:$0xff]
        %257 = vset.pattern.permute.xlu0 0
        %258 = vperm.xlu0 %257, %v255
        %v259 = vpop.permute.xlu0 %258
        %v261 = vmul.f32 %v253, %v259
        %v262 = vmul.f32 %v254, %v259
        %v263 = vld [vmem:[%s2] sm:$0xff]
        %265 = vset.pattern.permute.xlu0 0
        %266 = vperm.xlu0 %265, %v263
        %v267 = vpop.permute.xlu0 %266
        %v269 = vadd.f32 %v261, %v267
        %v270 = vadd.f32 %v262, %v267
        %v271 = vmax.f32 %v269, 0.0
        %v272 = vmax.f32 %v270, 0.0
        %v273 = vld [vmem:[%s3] sm:$0xff]
        %v274 = vld [vmem:[%s3 + $0x8] sm:$0xff]
        %v275 = vld [vmem:[%s3 + $0x10] sm:$0xff]
        %v276 = vld [vmem:[%s3 + $0x18] sm:$0xff]
        %v277 = vld [vmem:[%s3 + $0x20] sm:$0xff]
        %v278 = vld [vmem:[%s3 + $0x28] sm:$0xff]
        %v279 = vld [vmem:[%s3 + $0x30] sm:$0xff]
        %v280 = vld [vmem:[%s3 + $0x38] sm:$0xff]
        %v281 = vld [vmem:[%s3 + $0x40] sm:$0xff]
        %v282 = vld [vmem:[%s3 + $0x48] sm:$0xff]
        %v283 = vld [vmem:[%s3 + $0x50] sm:$0xff]
        %v284 = vld [vmem:[%s3 + $0x58] sm:$0xff]
        %v285 = vld [vmem:[%s3 + $0x60] sm:$0xff]
        %v286 = vld [vmem:[%s3 + $0x68] sm:$0xff]
        %v287 = vld [vmem:[%s3 + $0x70] sm:$0xff]
        %v288 = vld [vmem:[%s3 + $0x78] sm:$0xff]
        %v289 = vld [vmem:[%s3 + $0x80] sm:$0xff]
        %v290 = vld [vmem:[%s3 + $0x88] sm:$0xff]
        %v291 = vld [vmem:[%s3 + $0x90] sm:$0xff]
        %v292 = vld [vmem:[%s3 + $0x98] sm:$0xff]
        %v293 = vld [vmem:[%s3 + $0xa0] sm:$0xff]
        %v294 = vld [vmem:[%s3 + $0xa8] sm:$0xff]
        %v295 = vld [vmem:[%s3 + $0xb0] sm:$0xff]
        %v296 = vld [vmem:[%s3 + $0xb8] sm:$0xff]
        %v297 = vld [vmem:[%s3 + $0xc0] sm:$0xff]
        %v298 = vld [vmem:[%s3 + $0xc8] sm:$0xff]
        %v299 = vld [vmem:[%s3 + $0xd0] sm:$0xff]
        %v300 = vld [vmem:[%s3 + $0xd8] sm:$0xff]
        %v301 = vld [vmem:[%s3 + $0xe0] sm:$0xff]
        %v302 = vld [vmem:[%s3 + $0xe8] sm:$0xff]
        %v303 = vld [vmem:[%s3 + $0xf0] sm:$0xff]
        %v304 = vld [vmem:[%s3 + $0xf8] sm:$0xff]
        %305 = vmatprep.subr.mxu0 0.0
        %306 = vmatpush1.msra.mxu0 %v288
        %307 = vmatprep.subr.mxu0 0.0
        %308 = vmatpush1.msra.mxu0 %v287
        %309 = vmatprep.subr.mxu0 0.0
        %310 = vmatpush1.msra.mxu0 %v286
        %311 = vmatprep.subr.mxu0 0.0
        %312 = vmatpush1.msra.mxu0 %v285
        %313 = vmatprep.subr.mxu0 0.0
        %314 = vmatpush1.msra.mxu0 %v284
        %315 = vmatprep.subr.mxu0 0.0
        %316 = vmatpush1.msra.mxu0 %v283
        %317 = vmatprep.subr.mxu0 0.0
        %318 = vmatpush1.msra.mxu0 %v282
        %319 = vmatprep.subr.mxu0 0.0
        %320 = vmatpush1.msra.mxu0 %v281
        %321 = vmatprep.subr.mxu0 0.0
        %322 = vmatpush1.msra.mxu0 %v280
        %323 = vmatprep.subr.mxu0 0.0
        %324 = vmatpush1.msra.mxu0 %v279
        %325 = vmatprep.subr.mxu0 0.0
        %326 = vmatpush1.msra.mxu0 %v278
        %327 = vmatprep.subr.mxu0 0.0
        %328 = vmatpush1.msra.mxu0 %v277
        %329 = vmatprep.subr.mxu0 0.0
        %330 = vmatpush1.msra.mxu0 %v276
        %331 = vmatprep.subr.mxu0 0.0
        %332 = vmatpush1.msra.mxu0 %v275
        %333 = vmatprep.subr.mxu0 0.0
        %334 = vmatpush1.msra.mxu0 %v274
        %335 = vmatprep.subr.mxu0 0.0
        %336 = vmatpush1.msra.mxu0 %v273
        %337 = vmatprep.subr.mxu0 0.0
        %338 = vmatpush2.msra.mxu0 %v304
        %339 = vmatprep.subr.mxu0 0.0
        %340 = vmatpush2.msra.mxu0 %v303
        %341 = vmatprep.subr.mxu0 0.0
        %342 = vmatpush2.msra.mxu0 %v302
        %343 = vmatprep.subr.mxu0 0.0
        %344 = vmatpush2.msra.mxu0 %v301
        %345 = vmatprep.subr.mxu0 0.0
        %346 = vmatpush2.msra.mxu0 %v300
        %347 = vmatprep.subr.mxu0 0.0
        %348 = vmatpush2.msra.mxu0 %v299
        %349 = vmatprep.subr.mxu0 0.0
        %350 = vmatpush2.msra.mxu0 %v298
        %351 = vmatprep.subr.mxu0 0.0
        %352 = vmatpush2.msra.mxu0 %v297
        %353 = vmatprep.subr.mxu0 0.0
        %354 = vmatpush2.msra.mxu0 %v296
        %355 = vmatprep.subr.mxu0 0.0
        %356 = vmatpush2.msra.mxu0 %v295
        %357 = vmatprep.subr.mxu0 0.0
        %358 = vmatpush2.msra.mxu0 %v294
        %359 = vmatprep.subr.mxu0 0.0
        %360 = vmatpush2.msra.mxu0 %v293
        %361 = vmatprep.subr.mxu0 0.0
        %362 = vmatpush2.msra.mxu0 %v292
        %363 = vmatprep.subr.mxu0 0.0
        %364 = vmatpush2.msra.mxu0 %v291
        %365 = vmatprep.subr.mxu0 0.0
        %366 = vmatpush2.msra.mxu0 %v290
        %367 = vmatprep.subr.mxu0 0.0
        %368 = vmatpush2.msra.mxu0 %v289
        %369 = vmatprep.mubr.f32.mxu0 %v272
        %370 = vmatmul.mubr.f32.gmra.mxu0 %v271
        %v371 = vpop.f32.mrf.mxu0
        %v372 = vadd.f32 0.0, %v371
        %v373 = vpop.f32.mrf.mxu0
        %374 = vdwg.mxu0
        %v375 = vld [vmem:[%s4] sm:$0xff]
        %vm376 = vcmask 64512
        %v378 = vsel %vm376, %v375, 0
        %380 = vmatprep.subr.mxu0 0.0
        %381 = vmatpush1.msra.mxu0 0.0
        %382 = vmatprep.subr.mxu0 0.0
        %383 = vmatpush1.msra.mxu0 0.0
        %384 = vmatprep.subr.mxu0 0.0
        %385 = vmatpush1.msra.mxu0 0.0
        %386 = vmatprep.subr.mxu0 0.0
        %387 = vmatpush1.msra.mxu0 0.0
        %388 = vmatprep.subr.mxu0 0.0
        %389 = vmatpush1.msra.mxu0 0.0
        %390 = vmatprep.subr.mxu0 0.0
        %391 = vmatpush1.msra.mxu0 0.0
        %392 = vmatprep.subr.mxu0 0.0
        %393 = vmatpush1.msra.mxu0 0.0
        %394 = vmatprep.subr.mxu0 0.0
        %395 = vmatpush1.msra.mxu0 0.0
        %396 = vmatprep.subr.mxu0 0.0
        %397 = vmatpush1.msra.mxu0 0.0
        %398 = vmatprep.subr.mxu0 0.0
        %399 = vmatpush1.msra.mxu0 0.0
        %400 = vmatprep.subr.mxu0 0.0
        %401 = vmatpush1.msra.mxu0 0.0
        %402 = vmatprep.subr.mxu0 0.0
        %403 = vmatpush1.msra.mxu0 0.0
        %404 = vmatprep.subr.mxu0 0.0
        %405 = vmatpush1.msra.mxu0 0.0
        %406 = vmatprep.subr.mxu0 0.0
        %407 = vmatpush1.msra.mxu0 0.0
        %408 = vmatprep.subr.mxu0 0.0
        %409 = vmatpush1.msra.mxu0 0.0
        %410 = vmatprep.subr.mxu0 0.0
        %411 = vmatpush1.msra.mxu0 %v372
        %412 = vmatprep.subr.mxu0 0.0
        %413 = vmatpush2.msra.mxu0 0.0
        %414 = vmatprep.subr.mxu0 0.0
        %415 = vmatpush2.msra.mxu0 0.0
        %416 = vmatprep.subr.mxu0 0.0
        %417 = vmatpush2.msra.mxu0 0.0
        %418 = vmatprep.subr.mxu0 0.0
        %419 = vmatpush2.msra.mxu0 0.0
        %420 = vmatprep.subr.mxu0 0.0
        %421 = vmatpush2.msra.mxu0 0.0
        %422 = vmatprep.subr.mxu0 0.0
        %423 = vmatpush2.msra.mxu0 0.0
        %424 = vmatprep.subr.mxu0 0.0
        %425 = vmatpush2.msra.mxu0 0.0
        %426 = vmatprep.subr.mxu0 0.0
        %427 = vmatpush2.msra.mxu0 0.0
        %428 = vmatprep.subr.mxu0 0.0
        %429 = vmatpush2.msra.mxu0 0.0
        %430 = vmatprep.subr.mxu0 0.0
        %431 = vmatpush2.msra.mxu0 0.0
        %432 = vmatprep.subr.mxu0 0.0
        %433 = vmatpush2.msra.mxu0 0.0
        %434 = vmatprep.subr.mxu0 0.0
        %435 = vmatpush2.msra.mxu0 0.0
        %436 = vmatprep.subr.mxu0 0.0
        %437 = vmatpush2.msra.mxu0 0.0
        %438 = vmatprep.subr.mxu0 0.0
        %439 = vmatpush2.msra.mxu0 0.0
        %440 = vmatprep.subr.mxu0 0.0
        %441 = vmatpush2.msra.mxu0 0.0
        %442 = vmatprep.subr.mxu0 0.0
        %443 = vmatpush2.msra.mxu0 0.0
        %444 = vmatprep.mubr.f32.mxu0 0.0
        %445 = vmatmul.mubr.f32.gmra.mxu0 %v378
        %v446 = vpop.f32.mrf.mxu0
        %v447 = vadd.f32 0.0, %v446
        %v448 = vpop.f32.mrf.mxu0
        %449 = vdwg.mxu0
        %vm450 = vcmask 523264
        %451 = vst.msk [vmem:[%s242] sm:$0xff] %vm450, %v447
        %s452 = sand.u32 %s153, 1
        %s453 = scalar_lea.sflag [#allocation3], %s452
        %s454 = sand.u32 %s153, 1
        %s455 = smul.addr %s454, 8
        %s456 = scalar_lea.vmem [#allocation2], %s455
        // Predicated region
        $region41: #{tpu_custom_call.1} parent=39 // pred_check
          %p457 = pneg %p163
        $region42: #{tpu_custom_call.1} parent=39 // pred_check_branch
          %459 = sbr.rel (%p457) target = $region44
        $region43: #{tpu_custom_call.1} parent=39 // pred_region
          %s461 = ssub.s32 128, 128
          %462 = vsyncadd %s453, %s461
          %s463 = sadd.s32 %s24, %s23
          %s464 = smul.addr %s463, 128
          %s465 = scalar_lea.hbm %s5, %s464
          %s467 = sshll.u32 %s456, 4
          %s468 = int_to_ptr.vmem [resolvable:$true] %s467
          %470 = dma.vmem_to_hbm [thread:$0]  %s468, 128, %s465, %s453
        $region44: #{tpu_custom_call.1} parent=39 // pred_fallthru
          _
      $region40: #{tpu_custom_call.1} parent=5 // pred_fallthru
        _
      %p471 = scmp.le.s32.totalorder 2, %s14
      // Predicated region
      $region45: #{tpu_custom_call.1} parent=5 // pred_check
        %p472 = pneg %p471
      $region46: #{tpu_custom_call.1} parent=5 // pred_check_branch
        %474 = sbr.rel (%p472) target = $region48
      $region47: #{tpu_custom_call.1} parent=5 // pred_region
        %s475 = ssub.s32 %s14, 2
        // Predicated region
        $region49: #{tpu_custom_call.1} parent=47 // pred_check
          %p476 = pneg %p169
        $region50: #{tpu_custom_call.1} parent=47 // pred_check_branch
          %478 = sbr.rel (%p476) target = $region52
        $region51: #{tpu_custom_call.1} parent=47 // pred_region
          %s479 = sand.u32 %s154, 1
          %s480 = scalar_lea.sflag [#allocation3], %s479
          %s481 = sand.u32 %s154, 1
          %s482 = smul.addr %s481, 8
          %s483 = scalar_lea.vmem [#allocation2], %s482
          %484 = dma.done %s480, 128
        $region52: #{tpu_custom_call.1} parent=47 // pred_fallthru
          _
      $region48: #{tpu_custom_call.1} parent=5 // pred_fallthru
        _
    $region6: #{tpu_custom_call.1} parent=1 // loop_footer
      %s18 = sadd.s32 1, %s14
    $region7: #{tpu_custom_call.1} parent=1 // loop_footer_branch
      %13 = sbr.rel target = $region3
    $region8: #{tpu_custom_call.1} parent=1 // loop_exit
      _
    %485 = vsyncpa [#allocation3], 1
    %s486 = scalar_lea.sflag [#allocation3], 1
    %487 = vsyncpa %s486, 1

</llo_original>
